<compile_context>
chip_gen: v7x
topology: tpu7x:2x2x1
jax: 0.10.0
libtpu: 0.0.40
codegen_flags: <defaults>
</compile_context>

<pallas_src>
import jax
import jax.numpy as jnp
from jax.experimental import pallas as pl
from jax.experimental.pallas import tpu as pltpu  # noqa: F401  (no scratch needed at this size)


def lstm_kernel(x_ref, wih_t_ref, whh_t_ref, b_ref, gate_add_ref,
                wout_t_ref, bout_ref, out_ref):
    """Full LSTMCell recurrence + output projection, everything resident in VMEM.

    x_ref:        (B, L, F) f32   (as given by the caller, batch-major)
    wih_t_ref:    (F, 4H)   f32   = (pre_scale * weight_ih).T
    whh_t_ref:    (H, 4H)   bf16  = (pre_scale * weight_hh).T
    b_ref:        (1, 4H)   f32   = pre_scale * (bias_ih + bias_hh)
    gate_add_ref: (1, 4H)   f32   = 0.5 on i/f/o lane blocks, 0.0 on g block
    wout_t_ref:   (H, O)    f32   = output_proj.weight.T
    bout_ref:     (1, O)    f32
    out_ref:      (B, O)    f32
    """
    H = whh_t_ref.shape[0]
    B, L, F = x_ref.shape

    wih_t = wih_t_ref[...]                                   # (F, 4H) f32
    whh_t = whh_t_ref[...]                                   # (H, 4H) bf16, lives in vregs across the loop

    # Hoist the (1,4H) broadcasts out of the unrolled loop (JAX does not CSE them).
    bias = jnp.broadcast_to(b_ref[...], (B, 4 * H))          # (B, 4H) f32
    g_add = jnp.broadcast_to(gate_add_ref[...], (B, 4 * H))  # 0.5 on i/f/o, 0.0 on g
    g_mul = 1.0 - g_add                                      # 0.5 on i/f/o, 1.0 on g

    # Hoisted input projections for ALL timesteps (independent of h, so they sit
    # off the serial dependency chain). Static ref slices are cheap views.
    xp = [
        jnp.dot(x_ref[:, t, :], wih_t, preferred_element_type=jnp.float32) + bias
        for t in range(L)
    ]  # each (B, 4H) f32

    # Initial hidden/cell state = zeros (PyTorch LSTMCell default on first call).
    h = jnp.zeros((B, H), jnp.float32)
    c = jnp.zeros((B, H), jnp.float32)

    # num_layers is small & static -> unroll in Python; only h @ W_hh^T is on the
    # serial chain (one bf16 MXU push + two EUP pushes per step).
    for t in range(L):
        gates = xp[t] + jnp.dot(
            h.astype(jnp.bfloat16), whh_t, preferred_element_type=jnp.float32
        )  # (B, 4H) f32 -- exactly one f32 vreg at B=8, H=32

        # Single tanh over the whole vreg; affine fixup turns the pre-scaled
        # i/f/o lanes into sigmoids and leaves the g lanes as tanh.
        act = jnp.tanh(gates) * g_mul + g_add
        i_g = act[:, 0 * H:1 * H]
        f_g = act[:, 1 * H:2 * H]
        g_g = act[:, 2 * H:3 * H]
        o_g = act[:, 3 * H:4 * H]

        c = f_g * c + i_g * g_g
        h = o_g * jnp.tanh(c)

    out_ref[...] = (
        jnp.dot(h, wout_t_ref[...], preferred_element_type=jnp.float32)
        + bout_ref[...]
    ).astype(out_ref.dtype)


def prepare_params(params):
    """One-time prep: transpose weights, fuse biases, fold the sigmoid-as-tanh
    pre-scale (0.5 on i/f/o gate rows) into the weights, cast W_hh to bf16."""
    H = params["weight_hh"].shape[1]
    O = params["w_out"].shape[0]

    # Gate order is (i, f, g, o); only g keeps scale 1.0 (plain tanh).
    half = jnp.full((H,), 0.5, jnp.float32)
    pre_scale = jnp.concatenate([half, half, jnp.ones((H,), jnp.float32), half])  # (4H,)
    gate_add = jnp.concatenate([half, half, jnp.zeros((H,), jnp.float32), half])  # (4H,)

    wih = params["weight_ih"] * pre_scale[:, None]   # (4H, F)
    whh = params["weight_hh"] * pre_scale[:, None]   # (4H, H)
    bias = (params["bias_ih"] + params["bias_hh"]) * pre_scale

    return {
        "wih_t": wih.T.astype(jnp.float32),                          # (F, 4H) f32 (off-chain)
        "whh_t": whh.T.astype(jnp.bfloat16),                         # (H, 4H) bf16 (serial chain)
        "bias": bias.reshape(1, 4 * H).astype(jnp.float32),          # (1, 4H)
        "gate_add": gate_add.reshape(1, 4 * H),                      # (1, 4H)
        "wout_t": params["w_out"].T.astype(jnp.float32),             # (H, O)
        "bout": params["b_out"].reshape(1, O).astype(jnp.float32),   # (1, O)
    }


@jax.jit
def integrated_model_forward(x, prepped):
    """x: (B, L, F) float32 (passed straight through — no transpose/cast dispatch).
    prepped: output of prepare_params."""
    B, L, F = x.shape
    H = prepped["whh_t"].shape[0]
    O = prepped["wout_t"].shape[1]

    full = lambda shape: pl.BlockSpec(shape, lambda: tuple(0 for _ in shape))

    return pl.pallas_call(
        lstm_kernel,
        out_shape=jax.ShapeDtypeStruct((B, O), jnp.float32),
        in_specs=[
            full((B, L, F)),
            full((F, 4 * H)),
            full((H, 4 * H)),
            full((1, 4 * H)),
            full((1, 4 * H)),
            full((H, O)),
            full((1, O)),
        ],
        out_specs=full((B, O)),
    )(x, prepped["wih_t"], prepped["whh_t"], prepped["bias"], prepped["gate_add"],
      prepped["wout_t"], prepped["bout"])


def init_params(key, num_features, num_hidden, output_size):
    """Deterministic init mimicking PyTorch's uniform(-1/sqrt(H), 1/sqrt(H))."""
    ks = jax.random.split(key, 6)
    k_lstm = 1.0 / jnp.sqrt(num_hidden)
    k_lin = 1.0 / jnp.sqrt(num_hidden)
    u = lambda k, shape, s: jax.random.uniform(k, shape, jnp.float32, -s, s)
    return {
        "weight_ih": u(ks[0], (4 * num_hidden, num_features), k_lstm),
        "weight_hh": u(ks[1], (4 * num_hidden, num_hidden), k_lstm),
        "bias_ih": u(ks[2], (4 * num_hidden,), k_lstm),
        "bias_hh": u(ks[3], (4 * num_hidden,), k_lstm),
        "w_out": u(ks[4], (output_size, num_hidden), k_lin),
        "b_out": u(ks[5], (output_size,), k_lin),
    }


def reference_forward(x, params):
    """Pure-JAX f32 reference of the PyTorch forward (correctness check)."""
    B, L, F = x.shape
    H = params["weight_hh"].shape[1]
    h = jnp.zeros((B, H), jnp.float32)
    c = jnp.zeros((B, H), jnp.float32)
    for t in range(L):
        gates = (x[:, t, :] @ params["weight_ih"].T
                 + h @ params["weight_hh"].T
                 + params["bias_ih"] + params["bias_hh"])
        i_g = jax.nn.sigmoid(gates[:, 0 * H:1 * H])
        f_g = jax.nn.sigmoid(gates[:, 1 * H:2 * H])
        g_g = jnp.tanh(gates[:, 2 * H:3 * H])
        o_g = jax.nn.sigmoid(gates[:, 3 * H:4 * H])
        c = f_g * c + i_g * g_g
        h = o_g * jnp.tanh(c)
    return h @ params["w_out"].T + params["b_out"]


if __name__ == "__main__":
    batch = 8
    num_layers = 4
    num_features = 32
    num_hidden = 32     # 4H = 128 -> gates fill exactly one f32 vreg per row-tile
    output_size = 16

    key = jax.random.PRNGKey(0)
    k_x, k_p = jax.random.split(key)
    x = jax.random.normal(k_x, (batch, num_layers, num_features), jnp.float32)
    params = init_params(k_p, num_features, num_hidden, output_size)
    prepped = prepare_params(params)   # one-time weight layout / pre-scale / cast prep

    out = integrated_model_forward(x, prepped)
    out = jax.block_until_ready(out)

    ref = reference_forward(x, params)
    assert out.shape == (batch, output_size)
    # Tolerance tightened vs. previous version: only the recurrent h @ W_hh^T
    # term uses bf16 now; input/output projections and all gate math are f32.
    assert jnp.allclose(out, ref, atol=1e-2, rtol=1e-2), float(jnp.max(jnp.abs(out - ref)))

    print("KERNEL_OK")
</pallas_src>

<mosaic_0001>
module attributes {stable_mosaic.version = 11 : i64} {
  func.func @lstm_kernel(%arg0: memref<8x4x32xf32, #tpu.memory_space<vmem>>, %arg1: memref<32x128xf32, #tpu.memory_space<vmem>>, %arg2: memref<32x128xbf16, #tpu.memory_space<vmem>>, %arg3: memref<1x128xf32, #tpu.memory_space<vmem>>, %arg4: memref<1x128xf32, #tpu.memory_space<vmem>>, %arg5: memref<32x16xf32, #tpu.memory_space<vmem>>, %arg6: memref<1x16xf32, #tpu.memory_space<vmem>>, %arg7: memref<8x16xf32, #tpu.memory_space<vmem>>) attributes {dimension_semantics = [], scalar_prefetch = 0 : i64, scratch_operands = 0 : i64, tpu.core_type = #tpu.core_type<tc>} {
    %c0 = arith.constant 0 : index
    %c0_0 = arith.constant 0 : index
    %0 = vector.load %arg1[%c0, %c0_0] : memref<32x128xf32, #tpu.memory_space<vmem>>, vector<32x128xf32>
    %c0_1 = arith.constant 0 : index
    %c0_2 = arith.constant 0 : index
    %1 = vector.load %arg2[%c0_1, %c0_2] : memref<32x128xbf16, #tpu.memory_space<vmem>>, vector<32x128xbf16>
    %c0_3 = arith.constant 0 : index
    %c0_4 = arith.constant 0 : index
    %2 = vector.load %arg3[%c0_3, %c0_4] : memref<1x128xf32, #tpu.memory_space<vmem>>, vector<1x128xf32>
    %3 = vector.shape_cast %2 : vector<1x128xf32> to vector<1x128xf32>
    %4 = vector.broadcast %3 : vector<1x128xf32> to vector<8x128xf32>
    %c0_5 = arith.constant 0 : index
    %c0_6 = arith.constant 0 : index
    %5 = vector.load %arg4[%c0_5, %c0_6] : memref<1x128xf32, #tpu.memory_space<vmem>>, vector<1x128xf32>
    %6 = vector.shape_cast %5 : vector<1x128xf32> to vector<1x128xf32>
    %7 = vector.broadcast %6 : vector<1x128xf32> to vector<8x128xf32>
    %cst = arith.constant 1.000000e+00 : f32
    %8 = vector.broadcast %cst : f32 to vector<8x128xf32>
    %9 = arith.subf %8, %7 : vector<8x128xf32>
    %c0_7 = arith.constant 0 : index
    %c0_8 = arith.constant 0 : index
    %c0_9 = arith.constant 0 : index
    %10 = vector.load %arg0[%c0_7, %c0_8, %c0_9] : memref<8x4x32xf32, #tpu.memory_space<vmem>>, vector<8x1x32xf32>
    %11 = vector.shape_cast %10 : vector<8x1x32xf32> to vector<8x32xf32>
    %cst_10 = arith.constant dense<0.000000e+00> : vector<8x128xf32>
    %12 = tpu.matmul %11, %0, %cst_10 {dimension_numbers = #tpu.dot_dimension_numbers<[1], [0], [0], [1], [0, 0, 1, 1], [], []>} : vector<8x32xf32>, vector<32x128xf32>, vector<8x128xf32> -> vector<8x128xf32>
    %13 = arith.addf %12, %4 : vector<8x128xf32>
    %c0_11 = arith.constant 0 : index
    %c1 = arith.constant 1 : index
    %c0_12 = arith.constant 0 : index
    %14 = vector.load %arg0[%c0_11, %c1, %c0_12] : memref<8x4x32xf32, #tpu.memory_space<vmem>>, vector<8x1x32xf32>
    %15 = vector.shape_cast %14 : vector<8x1x32xf32> to vector<8x32xf32>
    %cst_13 = arith.constant dense<0.000000e+00> : vector<8x128xf32>
    %16 = tpu.matmul %15, %0, %cst_13 {dimension_numbers = #tpu.dot_dimension_numbers<[1], [0], [0], [1], [0, 0, 1, 1], [], []>} : vector<8x32xf32>, vector<32x128xf32>, vector<8x128xf32> -> vector<8x128xf32>
    %17 = arith.addf %16, %4 : vector<8x128xf32>
    %c0_14 = arith.constant 0 : index
    %c2 = arith.constant 2 : index
    %c0_15 = arith.constant 0 : index
    %18 = vector.load %arg0[%c0_14, %c2, %c0_15] : memref<8x4x32xf32, #tpu.memory_space<vmem>>, vector<8x1x32xf32>
    %19 = vector.shape_cast %18 : vector<8x1x32xf32> to vector<8x32xf32>
    %cst_16 = arith.constant dense<0.000000e+00> : vector<8x128xf32>
    %20 = tpu.matmul %19, %0, %cst_16 {dimension_numbers = #tpu.dot_dimension_numbers<[1], [0], [0], [1], [0, 0, 1, 1], [], []>} : vector<8x32xf32>, vector<32x128xf32>, vector<8x128xf32> -> vector<8x128xf32>
    %21 = arith.addf %20, %4 : vector<8x128xf32>
    %c0_17 = arith.constant 0 : index
    %c3 = arith.constant 3 : index
    %c0_18 = arith.constant 0 : index
    %22 = vector.load %arg0[%c0_17, %c3, %c0_18] : memref<8x4x32xf32, #tpu.memory_space<vmem>>, vector<8x1x32xf32>
    %23 = vector.shape_cast %22 : vector<8x1x32xf32> to vector<8x32xf32>
    %cst_19 = arith.constant dense<0.000000e+00> : vector<8x128xf32>
    %24 = tpu.matmul %23, %0, %cst_19 {dimension_numbers = #tpu.dot_dimension_numbers<[1], [0], [0], [1], [0, 0, 1, 1], [], []>} : vector<8x32xf32>, vector<32x128xf32>, vector<8x128xf32> -> vector<8x128xf32>
    %25 = arith.addf %24, %4 : vector<8x128xf32>
    %cst_20 = arith.constant 0.000000e+00 : f32
    %26 = vector.broadcast %cst_20 : f32 to vector<8x32xf32>
    %cst_21 = arith.constant 0.000000e+00 : f32
    %27 = vector.broadcast %cst_21 : f32 to vector<8x32xf32>
    %28 = arith.truncf %26 : vector<8x32xf32> to vector<8x32xbf16>
    %cst_22 = arith.constant dense<0.000000e+00> : vector<8x128xf32>
    %29 = tpu.matmul %28, %1, %cst_22 {dimension_numbers = #tpu.dot_dimension_numbers<[1], [0], [0], [1], [0, 0, 1, 1], [], []>} : vector<8x32xbf16>, vector<32x128xbf16>, vector<8x128xf32> -> vector<8x128xf32>
    %30 = arith.addf %13, %29 : vector<8x128xf32>
    %31 = math.tanh %30 : vector<8x128xf32>
    %32 = arith.mulf %31, %9 : vector<8x128xf32>
    %33 = arith.addf %32, %7 : vector<8x128xf32>
    %34 = vector.extract_strided_slice %33 {offsets = [0, 0], sizes = [8, 32], strides = [1, 1]} : vector<8x128xf32> to vector<8x32xf32>
    %35 = vector.extract_strided_slice %33 {offsets = [0, 32], sizes = [8, 32], strides = [1, 1]} : vector<8x128xf32> to vector<8x32xf32>
    %36 = vector.extract_strided_slice %33 {offsets = [0, 64], sizes = [8, 32], strides = [1, 1]} : vector<8x128xf32> to vector<8x32xf32>
    %37 = vector.extract_strided_slice %33 {offsets = [0, 96], sizes = [8, 32], strides = [1, 1]} : vector<8x128xf32> to vector<8x32xf32>
    %38 = arith.mulf %35, %27 : vector<8x32xf32>
    %39 = arith.mulf %34, %36 : vector<8x32xf32>
    %40 = arith.addf %38, %39 : vector<8x32xf32>
    %41 = math.tanh %40 : vector<8x32xf32>
    %42 = arith.mulf %37, %41 : vector<8x32xf32>
    %43 = arith.truncf %42 : vector<8x32xf32> to vector<8x32xbf16>
    %cst_23 = arith.constant dense<0.000000e+00> : vector<8x128xf32>
    %44 = tpu.matmul %43, %1, %cst_23 {dimension_numbers = #tpu.dot_dimension_numbers<[1], [0], [0], [1], [0, 0, 1, 1], [], []>} : vector<8x32xbf16>, vector<32x128xbf16>, vector<8x128xf32> -> vector<8x128xf32>
    %45 = arith.addf %17, %44 : vector<8x128xf32>
    %46 = math.tanh %45 : vector<8x128xf32>
    %47 = arith.mulf %46, %9 : vector<8x128xf32>
    %48 = arith.addf %47, %7 : vector<8x128xf32>
    %49 = vector.extract_strided_slice %48 {offsets = [0, 0], sizes = [8, 32], strides = [1, 1]} : vector<8x128xf32> to vector<8x32xf32>
    %50 = vector.extract_strided_slice %48 {offsets = [0, 32], sizes = [8, 32], strides = [1, 1]} : vector<8x128xf32> to vector<8x32xf32>
    %51 = vector.extract_strided_slice %48 {offsets = [0, 64], sizes = [8, 32], strides = [1, 1]} : vector<8x128xf32> to vector<8x32xf32>
    %52 = vector.extract_strided_slice %48 {offsets = [0, 96], sizes = [8, 32], strides = [1, 1]} : vector<8x128xf32> to vector<8x32xf32>
    %53 = arith.mulf %50, %40 : vector<8x32xf32>
    %54 = arith.mulf %49, %51 : vector<8x32xf32>
    %55 = arith.addf %53, %54 : vector<8x32xf32>
    %56 = math.tanh %55 : vector<8x32xf32>
    %57 = arith.mulf %52, %56 : vector<8x32xf32>
    %58 = arith.truncf %57 : vector<8x32xf32> to vector<8x32xbf16>
    %cst_24 = arith.constant dense<0.000000e+00> : vector<8x128xf32>
    %59 = tpu.matmul %58, %1, %cst_24 {dimension_numbers = #tpu.dot_dimension_numbers<[1], [0], [0], [1], [0, 0, 1, 1], [], []>} : vector<8x32xbf16>, vector<32x128xbf16>, vector<8x128xf32> -> vector<8x128xf32>
    %60 = arith.addf %21, %59 : vector<8x128xf32>
    %61 = math.tanh %60 : vector<8x128xf32>
    %62 = arith.mulf %61, %9 : vector<8x128xf32>
    %63 = arith.addf %62, %7 : vector<8x128xf32>
    %64 = vector.extract_strided_slice %63 {offsets = [0, 0], sizes = [8, 32], strides = [1, 1]} : vector<8x128xf32> to vector<8x32xf32>
    %65 = vector.extract_strided_slice %63 {offsets = [0, 32], sizes = [8, 32], strides = [1, 1]} : vector<8x128xf32> to vector<8x32xf32>
    %66 = vector.extract_strided_slice %63 {offsets = [0, 64], sizes = [8, 32], strides = [1, 1]} : vector<8x128xf32> to vector<8x32xf32>
    %67 = vector.extract_strided_slice %63 {offsets = [0, 96], sizes = [8, 32], strides = [1, 1]} : vector<8x128xf32> to vector<8x32xf32>
    %68 = arith.mulf %65, %55 : vector<8x32xf32>
    %69 = arith.mulf %64, %66 : vector<8x32xf32>
    %70 = arith.addf %68, %69 : vector<8x32xf32>
    %71 = math.tanh %70 : vector<8x32xf32>
    %72 = arith.mulf %67, %71 : vector<8x32xf32>
    %73 = arith.truncf %72 : vector<8x32xf32> to vector<8x32xbf16>
    %cst_25 = arith.constant dense<0.000000e+00> : vector<8x128xf32>
    %74 = tpu.matmul %73, %1, %cst_25 {dimension_numbers = #tpu.dot_dimension_numbers<[1], [0], [0], [1], [0, 0, 1, 1], [], []>} : vector<8x32xbf16>, vector<32x128xbf16>, vector<8x128xf32> -> vector<8x128xf32>
    %75 = arith.addf %25, %74 : vector<8x128xf32>
    %76 = math.tanh %75 : vector<8x128xf32>
    %77 = arith.mulf %76, %9 : vector<8x128xf32>
    %78 = arith.addf %77, %7 : vector<8x128xf32>
    %79 = vector.extract_strided_slice %78 {offsets = [0, 0], sizes = [8, 32], strides = [1, 1]} : vector<8x128xf32> to vector<8x32xf32>
    %80 = vector.extract_strided_slice %78 {offsets = [0, 32], sizes = [8, 32], strides = [1, 1]} : vector<8x128xf32> to vector<8x32xf32>
    %81 = vector.extract_strided_slice %78 {offsets = [0, 64], sizes = [8, 32], strides = [1, 1]} : vector<8x128xf32> to vector<8x32xf32>
    %82 = vector.extract_strided_slice %78 {offsets = [0, 96], sizes = [8, 32], strides = [1, 1]} : vector<8x128xf32> to vector<8x32xf32>
    %83 = arith.mulf %80, %70 : vector<8x32xf32>
    %84 = arith.mulf %79, %81 : vector<8x32xf32>
    %85 = arith.addf %83, %84 : vector<8x32xf32>
    %86 = math.tanh %85 : vector<8x32xf32>
    %87 = arith.mulf %82, %86 : vector<8x32xf32>
    %c0_26 = arith.constant 0 : index
    %c0_27 = arith.constant 0 : index
    %88 = vector.load %arg5[%c0_26, %c0_27] : memref<32x16xf32, #tpu.memory_space<vmem>>, vector<32x16xf32>
    %cst_28 = arith.constant dense<0.000000e+00> : vector<8x16xf32>
    %89 = tpu.matmul %87, %88, %cst_28 {dimension_numbers = #tpu.dot_dimension_numbers<[1], [0], [0], [1], [0, 0, 1, 1], [], []>} : vector<8x32xf32>, vector<32x16xf32>, vector<8x16xf32> -> vector<8x16xf32>
    %c0_29 = arith.constant 0 : index
    %c0_30 = arith.constant 0 : index
    %90 = vector.load %arg6[%c0_29, %c0_30] : memref<1x16xf32, #tpu.memory_space<vmem>>, vector<1x16xf32>
    %91 = vector.broadcast %90 : vector<1x16xf32> to vector<8x16xf32>
    %92 = arith.addf %89, %91 : vector<8x16xf32>
    %c0_31 = arith.constant 0 : index
    %c0_32 = arith.constant 0 : index
    %93 = vector.load %arg7[%c0_31, %c0_32] : memref<8x16xf32, #tpu.memory_space<vmem>>, vector<8x16xf32>
    tpu.vector_store %arg7[%c0_31, %c0_32], %92 {strides = array<i32>} : memref<8x16xf32, #tpu.memory_space<vmem>>, vector<8x16xf32>,
    return
  }
}

</mosaic_0001>

<llo_original>
// kernel: integrated_model_forward.1
$region0: #{integrated_model_forward.1}
  #allocation0 [shape = 'u32[]', space=smem, size = 0x4, offset = 0x4, fixed_abs, tag = 'smem constant byte address 0x4 - core index']
  #allocation1 [shape = 'u32[144,128]{1,0:T(1,128)}', space=vmem, size = 0x12000, scoped, tag = 'internal scratch']
  %s0 = inlined_call_operand.vmem [shape: f32[8,4,32], index: 0, kind: input, shape index: {}]
  %s1 = inlined_call_operand.vmem [shape: f32[32,128], index: 1, kind: input, shape index: {}]
  %s2 = inlined_call_operand.hbm [shape: bf16[32,128], index: 2, kind: input, shape index: {}]
  %s3 = inlined_call_operand.vmem [shape: f32[1,128], index: 3, kind: input, shape index: {}]
  %s4 = inlined_call_operand.vmem [shape: f32[1,128], index: 4, kind: input, shape index: {}]
  %s5 = inlined_call_operand.vmem [shape: f32[32,16], index: 5, kind: input, shape index: {}]
  %s6 = inlined_call_operand.hbm [shape: f32[1,16], index: 6, kind: input, shape index: {}]
  %s7 = inlined_call_operand.hbm [shape: f32[8,16], index: 7, kind: output, shape index: {}]
  %s8 = sld [smem:[#allocation0]]
  $region46: #{integrated_model_forward.1} parent=0
    _
  %s10 = ssub.s32 1, %s8
  %s11 = scalar_select 0, %s10, %s8
  $region1: #{integrated_model_forward.1} parent=0
    #allocation2 [shape = 'u8[8192]{0}', space=vmem, size = 0x2000, scoped, tag = 'input window, operand 2, single buffered']
    #allocation3 [shape = 's32[1]{0}', space=sflag, size = 0x4, scoped, tag = 'scoped memory for integrated_model_forward.1']
    #allocation4 [shape = 's32[1]{0}', space=sflag, size = 0x4, scoped, tag = 'scoped memory for integrated_model_forward.1']
    #allocation5 [shape = 'u8[512]{0}', space=vmem, size = 0x400, scoped, tag = 'input window, operand 6, single buffered']
    #allocation6 [shape = 's32[1]{0}', space=sflag, size = 0x4, scoped, tag = 'scoped memory for integrated_model_forward.1']
    #allocation7 [shape = 'u8[4096]{0}', space=vmem, size = 0x1000, scoped, tag = 'output window, operand 0, single buffered']
    %12 = vsyncpa [#allocation3], 0
    %13 = vsyncpa [#allocation6], 0
    %14 = vsyncpa [#allocation4], 0
    // Predicated region
    $region2: #{integrated_model_forward.1} parent=1 // pred_check
      _
    $region3: #{integrated_model_forward.1} parent=1 // pred_check_branch
      %16 = sbr.rel (0) target = $region5
    $region4: #{integrated_model_forward.1} parent=1 // pred_region
      _
    $region5: #{integrated_model_forward.1} parent=1 // pred_fallthru
      _
    // Predicated region
    $region6: #{integrated_model_forward.1} parent=1 // pred_check
      _
    $region7: #{integrated_model_forward.1} parent=1 // pred_check_branch
      %18 = sbr.rel (0) target = $region9
    $region8: #{integrated_model_forward.1} parent=1 // pred_region
      _
    $region9: #{integrated_model_forward.1} parent=1 // pred_fallthru
      _
    // Predicated region
    $region10: #{integrated_model_forward.1} parent=1 // pred_check
      _
    $region11: #{integrated_model_forward.1} parent=1 // pred_check_branch
      %20 = sbr.rel (0) target = $region13
    $region12: #{integrated_model_forward.1} parent=1 // pred_region
      %s22 = ssub.s32 256, 256
      %23 = vsyncadd [#allocation3], %s22
      %s24 = sshll.u32 [#allocation2], 4
      %s25 = int_to_ptr.vmem [resolvable:$true] %s24
      %30 = dma.hbm_to_vmem [thread:$0]  %s2, 256, %s25, [#allocation3], 64, 64, 4
    $region13: #{integrated_model_forward.1} parent=1 // pred_fallthru
      _
    // Predicated region
    $region14: #{integrated_model_forward.1} parent=1 // pred_check
      _
    $region15: #{integrated_model_forward.1} parent=1 // pred_check_branch
      %32 = sbr.rel (0) target = $region17
    $region16: #{integrated_model_forward.1} parent=1 // pred_region
      _
    $region17: #{integrated_model_forward.1} parent=1 // pred_fallthru
      _
    // Predicated region
    $region18: #{integrated_model_forward.1} parent=1 // pred_check
      _
    $region19: #{integrated_model_forward.1} parent=1 // pred_check_branch
      %34 = sbr.rel (0) target = $region21
    $region20: #{integrated_model_forward.1} parent=1 // pred_region
      _
    $region21: #{integrated_model_forward.1} parent=1 // pred_fallthru
      _
    // Predicated region
    $region22: #{integrated_model_forward.1} parent=1 // pred_check
      _
    $region23: #{integrated_model_forward.1} parent=1 // pred_check_branch
      %36 = sbr.rel (0) target = $region25
    $region24: #{integrated_model_forward.1} parent=1 // pred_region
      _
    $region25: #{integrated_model_forward.1} parent=1 // pred_fallthru
      _
    // Predicated region
    $region26: #{integrated_model_forward.1} parent=1 // pred_check
      _
    $region27: #{integrated_model_forward.1} parent=1 // pred_check_branch
      %38 = sbr.rel (0) target = $region29
    $region28: #{integrated_model_forward.1} parent=1 // pred_region
      %s40 = ssub.s32 16, 16
      %41 = vsyncadd [#allocation6], %s40
      %s43 = sshll.u32 [#allocation5], 4
      %s44 = int_to_ptr.vmem [resolvable:$true] %s43
      %46 = dma.hbm_to_vmem [thread:$0]  %s6, 16, %s44, [#allocation6]
    $region29: #{integrated_model_forward.1} parent=1 // pred_fallthru
      _
    // Predicated region
    $region30: #{integrated_model_forward.1} parent=1 // pred_check
      _
    $region31: #{integrated_model_forward.1} parent=1 // pred_check_branch
      %48 = sbr.rel (0) target = $region33
    $region32: #{integrated_model_forward.1} parent=1 // pred_region
      %49 = dma.done [#allocation3], 256
    $region33: #{integrated_model_forward.1} parent=1 // pred_fallthru
      _
    // Predicated region
    $region34: #{integrated_model_forward.1} parent=1 // pred_check
      _
    $region35: #{integrated_model_forward.1} parent=1 // pred_check_branch
      %51 = sbr.rel (0) target = $region37
    $region36: #{integrated_model_forward.1} parent=1 // pred_region
      %52 = dma.done [#allocation6], 16
    $region37: #{integrated_model_forward.1} parent=1 // pred_fallthru
      _
    %v54 = vld [vmem:[%s1] sm:$0xff]
    %v55 = vld [vmem:[%s1 + $0x8] sm:$0xff]
    %v56 = vld [vmem:[%s1 + $0x10] sm:$0xff]
    %v57 = vld [vmem:[%s1 + $0x18] sm:$0xff]
    %v58 = vld [vmem:[#allocation2] sm:$0xf]
    %v59 = vld [vmem:[#allocation2 + $0x4] sm:$0xf]
    %v60 = vld [vmem:[#allocation2 + $0x8] sm:$0xf]
    %v61 = vld [vmem:[#allocation2 + $0xc] sm:$0xf]
    %v62 = vld [vmem:[%s3] sm:$0x1]
    %v64 = vlaneseq
    %v65 = vshrl.u32 %v64, 7
    %v66 = vsub.s32 0, %v65
    %v67 = vrot.slane %v62, %v66
    %v69 = vld [vmem:[%s4] sm:$0x1]
    %v71 = vlaneseq
    %v72 = vshrl.u32 %v71, 7
    %v73 = vsub.s32 0, %v72
    %v74 = vrot.slane %v69, %v73
    %v76 = vsub.f32 1.0, %v74
    %v77 = vld [vmem:[%s0] sm:$0x1]
    %v78 = vld [vmem:[%s0 + $0x4] sm:$0x1]
    %v79 = vld [vmem:[%s0 + $0x8] sm:$0x1]
    %v80 = vld [vmem:[%s0 + $0xc] sm:$0x1]
    %v81 = vld [vmem:[%s0 + $0x10] sm:$0x1]
    %v82 = vld [vmem:[%s0 + $0x14] sm:$0x1]
    %v83 = vld [vmem:[%s0 + $0x18] sm:$0x1]
    %v84 = vld [vmem:[%s0 + $0x1c] sm:$0x1]
    %v93 = vrot.slane %v78, 7
    %vm94 = vcmask 1041409
    %v95 = vsel %vm94, %v93, %v77
    %v96 = vrot.slane %v79, 6
    %vm97 = vcmask 1042434
    %v98 = vsel %vm97, %v96, %v95
    %v99 = vrot.slane %v80, 5
    %vm100 = vcmask 1043459
    %v101 = vsel %vm100, %v99, %v98
    %v102 = vrot.slane %v81, 4
    %vm103 = vcmask 1044484
    %v104 = vsel %vm103, %v102, %v101
    %v105 = vrot.slane %v82, 3
    %vm106 = vcmask 1045509
    %v107 = vsel %vm106, %v105, %v104
    %v108 = vrot.slane %v83, 2
    %vm109 = vcmask 1046534
    %v110 = vsel %vm109, %v108, %v107
    %v111 = vrot.slane %v84, 1
    %vm112 = vcmask 1047559
    %v113 = vsel %vm112, %v111, %v110
    %vm114 = vcmask 261120
    %v115 = vsel %vm114, %v113, 0
    %117 = vmatprep.subr.mxu0 0.0
    %118 = vmatpush1.msra.mxu0 %v54
    %119 = vmatprep.subr.mxu0 0.0
    %120 = vmatpush1.msra.mxu0 %v55
    %121 = vmatprep.subr.mxu0 0.0
    %122 = vmatpush1.msra.mxu0 %v56
    %123 = vmatprep.subr.mxu0 0.0
    %124 = vmatpush1.msra.mxu0 %v57
    %125 = vmatprep.subr.mxu0 0.0
    %126 = vmatpush1.msra.mxu0 0.0
    %127 = vmatprep.subr.mxu0 0.0
    %128 = vmatpush1.msra.mxu0 0.0
    %129 = vmatprep.subr.mxu0 0.0
    %130 = vmatpush1.msra.mxu0 0.0
    %131 = vmatprep.subr.mxu0 0.0
    %132 = vmatpush1.msra.mxu0 0.0
    %133 = vmatprep.subr.mxu0 0.0
    %134 = vmatpush1.msra.mxu0 0.0
    %135 = vmatprep.subr.mxu0 0.0
    %136 = vmatpush1.msra.mxu0 0.0
    %137 = vmatprep.subr.mxu0 0.0
    %138 = vmatpush1.msra.mxu0 0.0
    %139 = vmatprep.subr.mxu0 0.0
    %140 = vmatpush1.msra.mxu0 0.0
    %141 = vmatprep.subr.mxu0 0.0
    %142 = vmatpush1.msra.mxu0 0.0
    %143 = vmatprep.subr.mxu0 0.0
    %144 = vmatpush1.msra.mxu0 0.0
    %145 = vmatprep.subr.mxu0 0.0
    %146 = vmatpush1.msra.mxu0 0.0
    %147 = vmatprep.subr.mxu0 0.0
    %148 = vmatpush1.msra.mxu0 0.0
    %149 = vmatprep.subr.mxu0 0.0
    %150 = vmatpush1.msra.mxu0 0.0
    %151 = vmatprep.subr.mxu0 0.0
    %152 = vmatpush1.msra.mxu0 0.0
    %153 = vmatprep.subr.mxu0 0.0
    %154 = vmatpush1.msra.mxu0 0.0
    %155 = vmatprep.subr.mxu0 0.0
    %156 = vmatpush1.msra.mxu0 0.0
    %157 = vmatprep.subr.mxu0 0.0
    %158 = vmatpush1.msra.mxu0 0.0
    %159 = vmatprep.subr.mxu0 0.0
    %160 = vmatpush1.msra.mxu0 0.0
    %161 = vmatprep.subr.mxu0 0.0
    %162 = vmatpush1.msra.mxu0 0.0
    %163 = vmatprep.subr.mxu0 0.0
    %164 = vmatpush1.msra.mxu0 0.0
    %165 = vmatprep.subr.mxu0 0.0
    %166 = vmatpush1.msra.mxu0 0.0
    %167 = vmatprep.subr.mxu0 0.0
    %168 = vmatpush1.msra.mxu0 0.0
    %169 = vmatprep.subr.mxu0 0.0
    %170 = vmatpush1.msra.mxu0 0.0
    %171 = vmatprep.subr.mxu0 0.0
    %172 = vmatpush1.msra.mxu0 0.0
    %173 = vmatprep.subr.mxu0 0.0
    %174 = vmatpush1.msra.mxu0 0.0
    %175 = vmatprep.subr.mxu0 0.0
    %176 = vmatpush1.msra.mxu0 0.0
    %177 = vmatprep.subr.mxu0 0.0
    %178 = vmatpush1.msra.mxu0 0.0
    %179 = vmatprep.subr.mxu0 0.0
    %180 = vmatpush1.msra.mxu0 0.0
    %181 = vmatprep.mubr.f32.mxu0 0.0
    %182 = vmatmul.mubr.f32.gmra.mrb[0].mxu0 %v115
    %v183 = vpop.f32.mrb[0].mxu0
    %v184 = vadd.f32 %v67, %v183
    %v185 = vpop.f32.mrb[0].mxu0
    %186 = vdwg.mxu0
    %v187 = vld [vmem:[%s0 + $0x1] sm:$0x1]
    %v188 = vld [vmem:[%s0 + $0x5] sm:$0x1]
    %v189 = vld [vmem:[%s0 + $0x9] sm:$0x1]
    %v190 = vld [vmem:[%s0 + $0xd] sm:$0x1]
    %v191 = vld [vmem:[%s0 + $0x11] sm:$0x1]
    %v192 = vld [vmem:[%s0 + $0x15] sm:$0x1]
    %v193 = vld [vmem:[%s0 + $0x19] sm:$0x1]
    %v194 = vld [vmem:[%s0 + $0x1d] sm:$0x1]
    %v203 = vrot.slane %v188, 7
    %v204 = vsel %vm94, %v203, %v187
    %v205 = vrot.slane %v189, 6
    %v206 = vsel %vm97, %v205, %v204
    %v207 = vrot.slane %v190, 5
    %v208 = vsel %vm100, %v207, %v206
    %v209 = vrot.slane %v191, 4
    %v210 = vsel %vm103, %v209, %v208
    %v211 = vrot.slane %v192, 3
    %v212 = vsel %vm106, %v211, %v210
    %v213 = vrot.slane %v193, 2
    %v214 = vsel %vm109, %v213, %v212
    %v215 = vrot.slane %v194, 1
    %v216 = vsel %vm112, %v215, %v214
    %v217 = vsel %vm114, %v216, 0
    %219 = vmatprep.subr.mxu0 0.0
    %220 = vmatpush1.msra.mxu0 %v54
    %221 = vmatprep.subr.mxu0 0.0
    %222 = vmatpush1.msra.mxu0 %v55
    %223 = vmatprep.subr.mxu0 0.0
    %224 = vmatpush1.msra.mxu0 %v56
    %225 = vmatprep.subr.mxu0 0.0
    %226 = vmatpush1.msra.mxu0 %v57
    %227 = vmatprep.subr.mxu0 0.0
    %228 = vmatpush1.msra.mxu0 0.0
    %229 = vmatprep.subr.mxu0 0.0
    %230 = vmatpush1.msra.mxu0 0.0
    %231 = vmatprep.subr.mxu0 0.0
    %232 = vmatpush1.msra.mxu0 0.0
    %233 = vmatprep.subr.mxu0 0.0
    %234 = vmatpush1.msra.mxu0 0.0
    %235 = vmatprep.subr.mxu0 0.0
    %236 = vmatpush1.msra.mxu0 0.0
    %237 = vmatprep.subr.mxu0 0.0
    %238 = vmatpush1.msra.mxu0 0.0
    %239 = vmatprep.subr.mxu0 0.0
    %240 = vmatpush1.msra.mxu0 0.0
    %241 = vmatprep.subr.mxu0 0.0
    %242 = vmatpush1.msra.mxu0 0.0
    %243 = vmatprep.subr.mxu0 0.0
    %244 = vmatpush1.msra.mxu0 0.0
    %245 = vmatprep.subr.mxu0 0.0
    %246 = vmatpush1.msra.mxu0 0.0
    %247 = vmatprep.subr.mxu0 0.0
    %248 = vmatpush1.msra.mxu0 0.0
    %249 = vmatprep.subr.mxu0 0.0
    %250 = vmatpush1.msra.mxu0 0.0
    %251 = vmatprep.subr.mxu0 0.0
    %252 = vmatpush1.msra.mxu0 0.0
    %253 = vmatprep.subr.mxu0 0.0
    %254 = vmatpush1.msra.mxu0 0.0
    %255 = vmatprep.subr.mxu0 0.0
    %256 = vmatpush1.msra.mxu0 0.0
    %257 = vmatprep.subr.mxu0 0.0
    %258 = vmatpush1.msra.mxu0 0.0
    %259 = vmatprep.subr.mxu0 0.0
    %260 = vmatpush1.msra.mxu0 0.0
    %261 = vmatprep.subr.mxu0 0.0
    %262 = vmatpush1.msra.mxu0 0.0
    %263 = vmatprep.subr.mxu0 0.0
    %264 = vmatpush1.msra.mxu0 0.0
    %265 = vmatprep.subr.mxu0 0.0
    %266 = vmatpush1.msra.mxu0 0.0
    %267 = vmatprep.subr.mxu0 0.0
    %268 = vmatpush1.msra.mxu0 0.0
    %269 = vmatprep.subr.mxu0 0.0
    %270 = vmatpush1.msra.mxu0 0.0
    %271 = vmatprep.subr.mxu0 0.0
    %272 = vmatpush1.msra.mxu0 0.0
    %273 = vmatprep.subr.mxu0 0.0
    %274 = vmatpush1.msra.mxu0 0.0
    %275 = vmatprep.subr.mxu0 0.0
    %276 = vmatpush1.msra.mxu0 0.0
    %277 = vmatprep.subr.mxu0 0.0
    %278 = vmatpush1.msra.mxu0 0.0
    %279 = vmatprep.subr.mxu0 0.0
    %280 = vmatpush1.msra.mxu0 0.0
    %281 = vmatprep.subr.mxu0 0.0
    %282 = vmatpush1.msra.mxu0 0.0
    %283 = vmatprep.mubr.f32.mxu0 0.0
    %284 = vmatmul.mubr.f32.gmra.mrb[0].mxu0 %v217
    %v285 = vpop.f32.mrb[0].mxu0
    %v286 = vadd.f32 %v67, %v285
    %v287 = vpop.f32.mrb[0].mxu0
    %288 = vdwg.mxu0
    %v289 = vld [vmem:[%s0 + $0x2] sm:$0x1]
    %v290 = vld [vmem:[%s0 + $0x6] sm:$0x1]
    %v291 = vld [vmem:[%s0 + $0xa] sm:$0x1]
    %v292 = vld [vmem:[%s0 + $0xe] sm:$0x1]
    %v293 = vld [vmem:[%s0 + $0x12] sm:$0x1]
    %v294 = vld [vmem:[%s0 + $0x16] sm:$0x1]
    %v295 = vld [vmem:[%s0 + $0x1a] sm:$0x1]
    %v296 = vld [vmem:[%s0 + $0x1e] sm:$0x1]
    %v305 = vrot.slane %v290, 7
    %v306 = vsel %vm94, %v305, %v289
    %v307 = vrot.slane %v291, 6
    %v308 = vsel %vm97, %v307, %v306
    %v309 = vrot.slane %v292, 5
    %v310 = vsel %vm100, %v309, %v308
    %v311 = vrot.slane %v293, 4
    %v312 = vsel %vm103, %v311, %v310
    %v313 = vrot.slane %v294, 3
    %v314 = vsel %vm106, %v313, %v312
    %v315 = vrot.slane %v295, 2
    %v316 = vsel %vm109, %v315, %v314
    %v317 = vrot.slane %v296, 1
    %v318 = vsel %vm112, %v317, %v316
    %v319 = vsel %vm114, %v318, 0
    %321 = vmatprep.subr.mxu0 0.0
    %322 = vmatpush1.msra.mxu0 %v54
    %323 = vmatprep.subr.mxu0 0.0
    %324 = vmatpush1.msra.mxu0 %v55
    %325 = vmatprep.subr.mxu0 0.0
    %326 = vmatpush1.msra.mxu0 %v56
    %327 = vmatprep.subr.mxu0 0.0
    %328 = vmatpush1.msra.mxu0 %v57
    %329 = vmatprep.subr.mxu0 0.0
    %330 = vmatpush1.msra.mxu0 0.0
    %331 = vmatprep.subr.mxu0 0.0
    %332 = vmatpush1.msra.mxu0 0.0
    %333 = vmatprep.subr.mxu0 0.0
    %334 = vmatpush1.msra.mxu0 0.0
    %335 = vmatprep.subr.mxu0 0.0
    %336 = vmatpush1.msra.mxu0 0.0
    %337 = vmatprep.subr.mxu0 0.0
    %338 = vmatpush1.msra.mxu0 0.0
    %339 = vmatprep.subr.mxu0 0.0
    %340 = vmatpush1.msra.mxu0 0.0
    %341 = vmatprep.subr.mxu0 0.0
    %342 = vmatpush1.msra.mxu0 0.0
    %343 = vmatprep.subr.mxu0 0.0
    %344 = vmatpush1.msra.mxu0 0.0
    %345 = vmatprep.subr.mxu0 0.0
    %346 = vmatpush1.msra.mxu0 0.0
    %347 = vmatprep.subr.mxu0 0.0
    %348 = vmatpush1.msra.mxu0 0.0
    %349 = vmatprep.subr.mxu0 0.0
    %350 = vmatpush1.msra.mxu0 0.0
    %351 = vmatprep.subr.mxu0 0.0
    %352 = vmatpush1.msra.mxu0 0.0
    %353 = vmatprep.subr.mxu0 0.0
    %354 = vmatpush1.msra.mxu0 0.0
    %355 = vmatprep.subr.mxu0 0.0
    %356 = vmatpush1.msra.mxu0 0.0
    %357 = vmatprep.subr.mxu0 0.0
    %358 = vmatpush1.msra.mxu0 0.0
    %359 = vmatprep.subr.mxu0 0.0
    %360 = vmatpush1.msra.mxu0 0.0
    %361 = vmatprep.subr.mxu0 0.0
    %362 = vmatpush1.msra.mxu0 0.0
    %363 = vmatprep.subr.mxu0 0.0
    %364 = vmatpush1.msra.mxu0 0.0
    %365 = vmatprep.subr.mxu0 0.0
    %366 = vmatpush1.msra.mxu0 0.0
    %367 = vmatprep.subr.mxu0 0.0
    %368 = vmatpush1.msra.mxu0 0.0
    %369 = vmatprep.subr.mxu0 0.0
    %370 = vmatpush1.msra.mxu0 0.0
    %371 = vmatprep.subr.mxu0 0.0
    %372 = vmatpush1.msra.mxu0 0.0
    %373 = vmatprep.subr.mxu0 0.0
    %374 = vmatpush1.msra.mxu0 0.0
    %375 = vmatprep.subr.mxu0 0.0
    %376 = vmatpush1.msra.mxu0 0.0
    %377 = vmatprep.subr.mxu0 0.0
    %378 = vmatpush1.msra.mxu0 0.0
    %379 = vmatprep.subr.mxu0 0.0
    %380 = vmatpush1.msra.mxu0 0.0
    %381 = vmatprep.subr.mxu0 0.0
    %382 = vmatpush1.msra.mxu0 0.0
    %383 = vmatprep.subr.mxu0 0.0
    %384 = vmatpush1.msra.mxu0 0.0
    %385 = vmatprep.mubr.f32.mxu0 0.0
    %386 = vmatmul.mubr.f32.gmra.mrb[0].mxu0 %v319
    %v387 = vpop.f32.mrb[0].mxu0
    %v388 = vadd.f32 %v67, %v387
    %v389 = vpop.f32.mrb[0].mxu0
    %390 = vdwg.mxu0
    %v391 = vld [vmem:[%s0 + $0x3] sm:$0x1]
    %v392 = vld [vmem:[%s0 + $0x7] sm:$0x1]
    %v393 = vld [vmem:[%s0 + $0xb] sm:$0x1]
    %v394 = vld [vmem:[%s0 + $0xf] sm:$0x1]
    %v395 = vld [vmem:[%s0 + $0x13] sm:$0x1]
    %v396 = vld [vmem:[%s0 + $0x17] sm:$0x1]
    %v397 = vld [vmem:[%s0 + $0x1b] sm:$0x1]
    %v398 = vld [vmem:[%s0 + $0x1f] sm:$0x1]
    %v407 = vrot.slane %v392, 7
    %v408 = vsel %vm94, %v407, %v391
    %v409 = vrot.slane %v393, 6
    %v410 = vsel %vm97, %v409, %v408
    %v411 = vrot.slane %v394, 5
    %v412 = vsel %vm100, %v411, %v410
    %v413 = vrot.slane %v395, 4
    %v414 = vsel %vm103, %v413, %v412
    %v415 = vrot.slane %v396, 3
    %v416 = vsel %vm106, %v415, %v414
    %v417 = vrot.slane %v397, 2
    %v418 = vsel %vm109, %v417, %v416
    %v419 = vrot.slane %v398, 1
    %v420 = vsel %vm112, %v419, %v418
    %v421 = vsel %vm114, %v420, 0
    %423 = vmatprep.subr.mxu0 0.0
    %424 = vmatpush1.msra.mxu0 %v54
    %425 = vmatprep.subr.mxu0 0.0
    %426 = vmatpush1.msra.mxu0 %v55
    %427 = vmatprep.subr.mxu0 0.0
    %428 = vmatpush1.msra.mxu0 %v56
    %429 = vmatprep.subr.mxu0 0.0
    %430 = vmatpush1.msra.mxu0 %v57
    %431 = vmatprep.subr.mxu0 0.0
    %432 = vmatpush1.msra.mxu0 0.0
    %433 = vmatprep.subr.mxu0 0.0
    %434 = vmatpush1.msra.mxu0 0.0
    %435 = vmatprep.subr.mxu0 0.0
    %436 = vmatpush1.msra.mxu0 0.0
    %437 = vmatprep.subr.mxu0 0.0
    %438 = vmatpush1.msra.mxu0 0.0
    %439 = vmatprep.subr.mxu0 0.0
    %440 = vmatpush1.msra.mxu0 0.0
    %441 = vmatprep.subr.mxu0 0.0
    %442 = vmatpush1.msra.mxu0 0.0
    %443 = vmatprep.subr.mxu0 0.0
    %444 = vmatpush1.msra.mxu0 0.0
    %445 = vmatprep.subr.mxu0 0.0
    %446 = vmatpush1.msra.mxu0 0.0
    %447 = vmatprep.subr.mxu0 0.0
    %448 = vmatpush1.msra.mxu0 0.0
    %449 = vmatprep.subr.mxu0 0.0
    %450 = vmatpush1.msra.mxu0 0.0
    %451 = vmatprep.subr.mxu0 0.0
    %452 = vmatpush1.msra.mxu0 0.0
    %453 = vmatprep.subr.mxu0 0.0
    %454 = vmatpush1.msra.mxu0 0.0
    %455 = vmatprep.subr.mxu0 0.0
    %456 = vmatpush1.msra.mxu0 0.0
    %457 = vmatprep.subr.mxu0 0.0
    %458 = vmatpush1.msra.mxu0 0.0
    %459 = vmatprep.subr.mxu0 0.0
    %460 = vmatpush1.msra.mxu0 0.0
    %461 = vmatprep.subr.mxu0 0.0
    %462 = vmatpush1.msra.mxu0 0.0
    %463 = vmatprep.subr.mxu0 0.0
    %464 = vmatpush1.msra.mxu0 0.0
    %465 = vmatprep.subr.mxu0 0.0
    %466 = vmatpush1.msra.mxu0 0.0
    %467 = vmatprep.subr.mxu0 0.0
    %468 = vmatpush1.msra.mxu0 0.0
    %469 = vmatprep.subr.mxu0 0.0
    %470 = vmatpush1.msra.mxu0 0.0
    %471 = vmatprep.subr.mxu0 0.0
    %472 = vmatpush1.msra.mxu0 0.0
    %473 = vmatprep.subr.mxu0 0.0
    %474 = vmatpush1.msra.mxu0 0.0
    %475 = vmatprep.subr.mxu0 0.0
    %476 = vmatpush1.msra.mxu0 0.0
    %477 = vmatprep.subr.mxu0 0.0
    %478 = vmatpush1.msra.mxu0 0.0
    %479 = vmatprep.subr.mxu0 0.0
    %480 = vmatpush1.msra.mxu0 0.0
    %481 = vmatprep.subr.mxu0 0.0
    %482 = vmatpush1.msra.mxu0 0.0
    %483 = vmatprep.subr.mxu0 0.0
    %484 = vmatpush1.msra.mxu0 0.0
    %485 = vmatprep.subr.mxu0 0.0
    %486 = vmatpush1.msra.mxu0 0.0
    %487 = vmatprep.mubr.f32.mxu0 0.0
    %488 = vmatmul.mubr.f32.gmra.mrb[0].mxu0 %v421
    %v489 = vpop.f32.mrb[0].mxu0
    %v490 = vadd.f32 %v67, %v489
    %v491 = vpop.f32.mrb[0].mxu0
    %492 = vdwg.mxu0
    %v497 = vunpack.c.l.b16 %v58
    %v498 = vunpack.c.l.b16 %v59
    %v499 = vunpack.c.l.b16 %v60
    %v500 = vunpack.c.l.b16 %v61
    %v501 = vpack.c.b16 %v498, %v497
    %v502 = vpack.c.b16 %v500, %v499
    %v506 = vsel %vm114, 0, 0
    %508 = vmatprep.subr.bf16.mxu0 0
    %509 = vmatpush1.bf16.msra.mxu0 %v501
    %510 = vmatprep.subr.bf16.mxu0 0
    %511 = vmatpush1.bf16.msra.mxu0 %v502
    %512 = vmatprep.subr.bf16.mxu0 0
    %513 = vmatpush1.bf16.msra.mxu0 0
    %514 = vmatprep.subr.bf16.mxu0 0
    %515 = vmatpush1.bf16.msra.mxu0 0
    %516 = vmatprep.subr.bf16.mxu0 0
    %517 = vmatpush1.bf16.msra.mxu0 0
    %518 = vmatprep.subr.bf16.mxu0 0
    %519 = vmatpush1.bf16.msra.mxu0 0
    %520 = vmatprep.subr.bf16.mxu0 0
    %521 = vmatpush1.bf16.msra.mxu0 0
    %522 = vmatprep.subr.bf16.mxu0 0
    %523 = vmatpush1.bf16.msra.mxu0 0
    %524 = vmatprep.subr.bf16.mxu0 0
    %525 = vmatpush1.bf16.msra.mxu0 0
    %526 = vmatprep.subr.bf16.mxu0 0
    %527 = vmatpush1.bf16.msra.mxu0 0
    %528 = vmatprep.subr.bf16.mxu0 0
    %529 = vmatpush1.bf16.msra.mxu0 0
    %530 = vmatprep.subr.bf16.mxu0 0
    %531 = vmatpush1.bf16.msra.mxu0 0
    %532 = vmatprep.subr.bf16.mxu0 0
    %533 = vmatpush1.bf16.msra.mxu0 0
    %534 = vmatprep.subr.bf16.mxu0 0
    %535 = vmatpush1.bf16.msra.mxu0 0
    %536 = vmatprep.subr.bf16.mxu0 0
    %537 = vmatpush1.bf16.msra.mxu0 0
    %538 = vmatprep.subr.bf16.mxu0 0
    %539 = vmatpush1.bf16.msra.mxu0 0
    %540 = vmatprep.mubr.bf16.mxu0 0
    %541 = vmatmul.mubr.bf16.gmra.mrb[0].mxu0 %v506
    %v542 = vpop.f32.mrb[0].mxu0
    %v543 = vadd.f32 0.0, %v542
    %v544 = vpop.f32.mrb[0].mxu0
    %v545 = vpop.f32.mrb[0].mxu0
    %v546 = vpop.f32.mrb[0].mxu0
    %547 = vdwg.mxu0
    %v548 = vadd.f32 %v184, %v543
    %v549 = vtanh.pop %v548
    %v550 = vmul.f32 %v549, %v76
    %v551 = vadd.f32 %v550, %v74
    %v552 = vmul.f32 %v551, 0.0
    %554 = vrot.lane.b32.xlu0 %v551, 64
    %v555 = vpop.permute.xlu0 %554
    %v557 = vmul.f32 %v551, %v555
    %559 = vrot.lane.b32.xlu0 %v557, 32
    %v560 = vpop.permute.xlu0 %559
    %v562 = vadd.f32 %v552, %v560
    %v563 = vtanh.pop %v562
    %565 = vrot.lane.b32.xlu0 %v563, 64
    %v566 = vpop.permute.xlu0 %565
    %v568 = vmul.f32 %v551, %v566
    %v569 = vpack.c.bf16 %v568, %v568
    %571 = vrot.lane.b32.xlu0 %v569, 32
    %v572 = vpop.permute.xlu0 %571
    %v574 = vsel %vm114, %v572, 0
    %576 = vmatprep.subr.bf16.mxu0 0
    %577 = vmatpush1.bf16.msra.mxu0 %v501
    %578 = vmatprep.subr.bf16.mxu0 0
    %579 = vmatpush1.bf16.msra.mxu0 %v502
    %580 = vmatprep.subr.bf16.mxu0 0
    %581 = vmatpush1.bf16.msra.mxu0 0
    %582 = vmatprep.subr.bf16.mxu0 0
    %583 = vmatpush1.bf16.msra.mxu0 0
    %584 = vmatprep.subr.bf16.mxu0 0
    %585 = vmatpush1.bf16.msra.mxu0 0
    %586 = vmatprep.subr.bf16.mxu0 0
    %587 = vmatpush1.bf16.msra.mxu0 0
    %588 = vmatprep.subr.bf16.mxu0 0
    %589 = vmatpush1.bf16.msra.mxu0 0
    %590 = vmatprep.subr.bf16.mxu0 0
    %591 = vmatpush1.bf16.msra.mxu0 0
    %592 = vmatprep.subr.bf16.mxu0 0
    %593 = vmatpush1.bf16.msra.mxu0 0
    %594 = vmatprep.subr.bf16.mxu0 0
    %595 = vmatpush1.bf16.msra.mxu0 0
    %596 = vmatprep.subr.bf16.mxu0 0
    %597 = vmatpush1.bf16.msra.mxu0 0
    %598 = vmatprep.subr.bf16.mxu0 0
    %599 = vmatpush1.bf16.msra.mxu0 0
    %600 = vmatprep.subr.bf16.mxu0 0
    %601 = vmatpush1.bf16.msra.mxu0 0
    %602 = vmatprep.subr.bf16.mxu0 0
    %603 = vmatpush1.bf16.msra.mxu0 0
    %604 = vmatprep.subr.bf16.mxu0 0
    %605 = vmatpush1.bf16.msra.mxu0 0
    %606 = vmatprep.subr.bf16.mxu0 0
    %607 = vmatpush1.bf16.msra.mxu0 0
    %608 = vmatprep.mubr.bf16.mxu0 0
    %609 = vmatmul.mubr.bf16.gmra.mrb[0].mxu0 %v574
    %v610 = vpop.f32.mrb[0].mxu0
    %v611 = vadd.f32 0.0, %v610
    %v612 = vpop.f32.mrb[0].mxu0
    %v613 = vpop.f32.mrb[0].mxu0
    %v614 = vpop.f32.mrb[0].mxu0
    %615 = vdwg.mxu0
    %v616 = vadd.f32 %v286, %v611
    %v617 = vtanh.pop %v616
    %v618 = vmul.f32 %v617, %v76
    %v619 = vadd.f32 %v618, %v74
    %v620 = vmul.f32 %v619, %v562
    %622 = vrot.lane.b32.xlu0 %v619, 64
    %v623 = vpop.permute.xlu0 %622
    %v625 = vmul.f32 %v619, %v623
    %627 = vrot.lane.b32.xlu0 %v625, 32
    %v628 = vpop.permute.xlu0 %627
    %v630 = vadd.f32 %v620, %v628
    %v631 = vtanh.pop %v630
    %633 = vrot.lane.b32.xlu0 %v631, 64
    %v634 = vpop.permute.xlu0 %633
    %v636 = vmul.f32 %v619, %v634
    %v637 = vpack.c.bf16 %v636, %v636
    %639 = vrot.lane.b32.xlu0 %v637, 32
    %v640 = vpop.permute.xlu0 %639
    %v642 = vsel %vm114, %v640, 0
    %644 = vmatprep.subr.bf16.mxu0 0
    %645 = vmatpush1.bf16.msra.mxu0 %v501
    %646 = vmatprep.subr.bf16.mxu0 0
    %647 = vmatpush1.bf16.msra.mxu0 %v502
    %648 = vmatprep.subr.bf16.mxu0 0
    %649 = vmatpush1.bf16.msra.mxu0 0
    %650 = vmatprep.subr.bf16.mxu0 0
    %651 = vmatpush1.bf16.msra.mxu0 0
    %652 = vmatprep.subr.bf16.mxu0 0
    %653 = vmatpush1.bf16.msra.mxu0 0
    %654 = vmatprep.subr.bf16.mxu0 0
    %655 = vmatpush1.bf16.msra.mxu0 0
    %656 = vmatprep.subr.bf16.mxu0 0
    %657 = vmatpush1.bf16.msra.mxu0 0
    %658 = vmatprep.subr.bf16.mxu0 0
    %659 = vmatpush1.bf16.msra.mxu0 0
    %660 = vmatprep.subr.bf16.mxu0 0
    %661 = vmatpush1.bf16.msra.mxu0 0
    %662 = vmatprep.subr.bf16.mxu0 0
    %663 = vmatpush1.bf16.msra.mxu0 0
    %664 = vmatprep.subr.bf16.mxu0 0
    %665 = vmatpush1.bf16.msra.mxu0 0
    %666 = vmatprep.subr.bf16.mxu0 0
    %667 = vmatpush1.bf16.msra.mxu0 0
    %668 = vmatprep.subr.bf16.mxu0 0
    %669 = vmatpush1.bf16.msra.mxu0 0
    %670 = vmatprep.subr.bf16.mxu0 0
    %671 = vmatpush1.bf16.msra.mxu0 0
    %672 = vmatprep.subr.bf16.mxu0 0
    %673 = vmatpush1.bf16.msra.mxu0 0
    %674 = vmatprep.subr.bf16.mxu0 0
    %675 = vmatpush1.bf16.msra.mxu0 0
    %676 = vmatprep.mubr.bf16.mxu0 0
    %677 = vmatmul.mubr.bf16.gmra.mrb[0].mxu0 %v642
    %v678 = vpop.f32.mrb[0].mxu0
    %v679 = vadd.f32 0.0, %v678
    %v680 = vpop.f32.mrb[0].mxu0
    %v681 = vpop.f32.mrb[0].mxu0
    %v682 = vpop.f32.mrb[0].mxu0
    %683 = vdwg.mxu0
    %v684 = vadd.f32 %v388, %v679
    %v685 = vtanh.pop %v684
    %v686 = vmul.f32 %v685, %v76
    %v687 = vadd.f32 %v686, %v74
    %v688 = vmul.f32 %v687, %v630
    %690 = vrot.lane.b32.xlu0 %v687, 64
    %v691 = vpop.permute.xlu0 %690
    %v693 = vmul.f32 %v687, %v691
    %695 = vrot.lane.b32.xlu0 %v693, 32
    %v696 = vpop.permute.xlu0 %695
    %v698 = vadd.f32 %v688, %v696
    %v699 = vtanh.pop %v698
    %701 = vrot.lane.b32.xlu0 %v699, 64
    %v702 = vpop.permute.xlu0 %701
    %v704 = vmul.f32 %v687, %v702
    %v705 = vpack.c.bf16 %v704, %v704
    %707 = vrot.lane.b32.xlu0 %v705, 32
    %v708 = vpop.permute.xlu0 %707
    %v710 = vsel %vm114, %v708, 0
    %712 = vmatprep.subr.bf16.mxu0 0
    %713 = vmatpush1.bf16.msra.mxu0 %v501
    %714 = vmatprep.subr.bf16.mxu0 0
    %715 = vmatpush1.bf16.msra.mxu0 %v502
    %716 = vmatprep.subr.bf16.mxu0 0
    %717 = vmatpush1.bf16.msra.mxu0 0
    %718 = vmatprep.subr.bf16.mxu0 0
    %719 = vmatpush1.bf16.msra.mxu0 0
    %720 = vmatprep.subr.bf16.mxu0 0
    %721 = vmatpush1.bf16.msra.mxu0 0
    %722 = vmatprep.subr.bf16.mxu0 0
    %723 = vmatpush1.bf16.msra.mxu0 0
    %724 = vmatprep.subr.bf16.mxu0 0
    %725 = vmatpush1.bf16.msra.mxu0 0
    %726 = vmatprep.subr.bf16.mxu0 0
    %727 = vmatpush1.bf16.msra.mxu0 0
    %728 = vmatprep.subr.bf16.mxu0 0
    %729 = vmatpush1.bf16.msra.mxu0 0
    %730 = vmatprep.subr.bf16.mxu0 0
    %731 = vmatpush1.bf16.msra.mxu0 0
    %732 = vmatprep.subr.bf16.mxu0 0
    %733 = vmatpush1.bf16.msra.mxu0 0
    %734 = vmatprep.subr.bf16.mxu0 0
    %735 = vmatpush1.bf16.msra.mxu0 0
    %736 = vmatprep.subr.bf16.mxu0 0
    %737 = vmatpush1.bf16.msra.mxu0 0
    %738 = vmatprep.subr.bf16.mxu0 0
    %739 = vmatpush1.bf16.msra.mxu0 0
    %740 = vmatprep.subr.bf16.mxu0 0
    %741 = vmatpush1.bf16.msra.mxu0 0
    %742 = vmatprep.subr.bf16.mxu0 0
    %743 = vmatpush1.bf16.msra.mxu0 0
    %744 = vmatprep.mubr.bf16.mxu0 0
    %745 = vmatmul.mubr.bf16.gmra.mrb[0].mxu0 %v710
    %v746 = vpop.f32.mrb[0].mxu0
    %v747 = vadd.f32 0.0, %v746
    %v748 = vpop.f32.mrb[0].mxu0
    %v749 = vpop.f32.mrb[0].mxu0
    %v750 = vpop.f32.mrb[0].mxu0
    %751 = vdwg.mxu0
    %v752 = vadd.f32 %v490, %v747
    %v753 = vtanh.pop %v752
    %v754 = vmul.f32 %v753, %v76
    %v755 = vadd.f32 %v754, %v74
    %v756 = vmul.f32 %v755, %v698
    %758 = vrot.lane.b32.xlu0 %v755, 64
    %v759 = vpop.permute.xlu0 %758
    %v761 = vmul.f32 %v755, %v759
    %763 = vrot.lane.b32.xlu0 %v761, 32
    %v764 = vpop.permute.xlu0 %763
    %v766 = vadd.f32 %v756, %v764
    %v767 = vtanh.pop %v766
    %769 = vrot.lane.b32.xlu0 %v767, 64
    %v770 = vpop.permute.xlu0 %769
    %v772 = vmul.f32 %v755, %v770
    %v773 = vld [vmem:[%s5] sm:$0xff]
    %v774 = vld [vmem:[%s5 + $0x8] sm:$0xff]
    %v775 = vld [vmem:[%s5 + $0x10] sm:$0xff]
    %v776 = vld [vmem:[%s5 + $0x18] sm:$0xff]
    %v777 = vld [vmem:[#allocation5] sm:$0x1]
    %v779 = vlaneseq
    %v780 = vshrl.u32 %v779, 7
    %v781 = vsub.s32 0, %v780
    %v782 = vrot.slane %v777, %v781
    %785 = vrot.lane.b32.xlu0 %v772, 32
    %v786 = vpop.permute.xlu0 %785
    %v787 = vsel %vm114, %v786, 0
    %789 = vmatprep.subr.mxu0 0.0
    %790 = vmatpush1.msra.mxu0 %v773
    %791 = vmatprep.subr.mxu0 0.0
    %792 = vmatpush1.msra.mxu0 %v774
    %793 = vmatprep.subr.mxu0 0.0
    %794 = vmatpush1.msra.mxu0 %v775
    %795 = vmatprep.subr.mxu0 0.0
    %796 = vmatpush1.msra.mxu0 %v776
    %797 = vmatprep.subr.mxu0 0.0
    %798 = vmatpush1.msra.mxu0 0.0
    %799 = vmatprep.subr.mxu0 0.0
    %800 = vmatpush1.msra.mxu0 0.0
    %801 = vmatprep.subr.mxu0 0.0
    %802 = vmatpush1.msra.mxu0 0.0
    %803 = vmatprep.subr.mxu0 0.0
    %804 = vmatpush1.msra.mxu0 0.0
    %805 = vmatprep.subr.mxu0 0.0
    %806 = vmatpush1.msra.mxu0 0.0
    %807 = vmatprep.subr.mxu0 0.0
    %808 = vmatpush1.msra.mxu0 0.0
    %809 = vmatprep.subr.mxu0 0.0
    %810 = vmatpush1.msra.mxu0 0.0
    %811 = vmatprep.subr.mxu0 0.0
    %812 = vmatpush1.msra.mxu0 0.0
    %813 = vmatprep.subr.mxu0 0.0
    %814 = vmatpush1.msra.mxu0 0.0
    %815 = vmatprep.subr.mxu0 0.0
    %816 = vmatpush1.msra.mxu0 0.0
    %817 = vmatprep.subr.mxu0 0.0
    %818 = vmatpush1.msra.mxu0 0.0
    %819 = vmatprep.subr.mxu0 0.0
    %820 = vmatpush1.msra.mxu0 0.0
    %821 = vmatprep.subr.mxu0 0.0
    %822 = vmatpush1.msra.mxu0 0.0
    %823 = vmatprep.subr.mxu0 0.0
    %824 = vmatpush1.msra.mxu0 0.0
    %825 = vmatprep.subr.mxu0 0.0
    %826 = vmatpush1.msra.mxu0 0.0
    %827 = vmatprep.subr.mxu0 0.0
    %828 = vmatpush1.msra.mxu0 0.0
    %829 = vmatprep.subr.mxu0 0.0
    %830 = vmatpush1.msra.mxu0 0.0
    %831 = vmatprep.subr.mxu0 0.0
    %832 = vmatpush1.msra.mxu0 0.0
    %833 = vmatprep.subr.mxu0 0.0
    %834 = vmatpush1.msra.mxu0 0.0
    %835 = vmatprep.subr.mxu0 0.0
    %836 = vmatpush1.msra.mxu0 0.0
    %837 = vmatprep.subr.mxu0 0.0
    %838 = vmatpush1.msra.mxu0 0.0
    %839 = vmatprep.subr.mxu0 0.0
    %840 = vmatpush1.msra.mxu0 0.0
    %841 = vmatprep.subr.mxu0 0.0
    %842 = vmatpush1.msra.mxu0 0.0
    %843 = vmatprep.subr.mxu0 0.0
    %844 = vmatpush1.msra.mxu0 0.0
    %845 = vmatprep.subr.mxu0 0.0
    %846 = vmatpush1.msra.mxu0 0.0
    %847 = vmatprep.subr.mxu0 0.0
    %848 = vmatpush1.msra.mxu0 0.0
    %849 = vmatprep.subr.mxu0 0.0
    %850 = vmatpush1.msra.mxu0 0.0
    %851 = vmatprep.subr.mxu0 0.0
    %852 = vmatpush1.msra.mxu0 0.0
    %853 = vmatprep.mubr.f32.mxu0 0.0
    %854 = vmatmul.mubr.f32.gmra.mrb[0].mxu0 %v787
    %v855 = vpop.f32.mrb[0].mxu0
    %v856 = vadd.f32 %v782, %v855
    %v857 = vpop.f32.mrb[0].mxu0
    %858 = vdwg.mxu0
    %vm859 = vcmask 130048
    %860 = vst.msk [vmem:[#allocation7] sm:$0xff] %vm859, %v856
    // Predicated region
    $region38: #{integrated_model_forward.1} parent=1 // pred_check
      _
    $region39: #{integrated_model_forward.1} parent=1 // pred_check_branch
      %862 = sbr.rel (0) target = $region41
    $region40: #{integrated_model_forward.1} parent=1 // pred_region
      %s864 = ssub.s32 128, 128
      %865 = vsyncadd [#allocation4], %s864
      %s867 = sshll.u32 [#allocation7], 4
      %s868 = int_to_ptr.vmem [resolvable:$true] %s867
      %870 = dma.vmem_to_hbm [thread:$0]  %s868, 128, %s7, [#allocation4]
    $region41: #{integrated_model_forward.1} parent=1 // pred_fallthru
      _
    // Predicated region
    $region42: #{integrated_model_forward.1} parent=1 // pred_check
      _
    $region43: #{integrated_model_forward.1} parent=1 // pred_check_branch
      %872 = sbr.rel (0) target = $region45
    $region44: #{integrated_model_forward.1} parent=1 // pred_region
      %873 = dma.done [#allocation4], 128
    $region45: #{integrated_model_forward.1} parent=1 // pred_fallthru
      _
    %874 = vsyncpa [#allocation3], 1
    %875 = vsyncpa [#allocation6], 1
    %876 = vsyncpa [#allocation4], 1

</llo_original>
